<compile_context>
chip_gen: v6e
topology: v6e:2x2x1
jax: 0.10.0
libtpu: 0.0.40
codegen_flags: <defaults>
</compile_context>

<pallas_src>
import math

import jax
import jax.numpy as jnp
from jax.experimental import pallas as pl
from jax.experimental.pallas import tpu as pltpu

# ----------------------------- problem sizes --------------------------------
B = 2                      # batch
C_IN, H_IN, W_IN = 4, 16, 16
D_IN = C_IN * H_IN * W_IN  # 1024
H1 = 64                    # encoder hidden width
Z_DIM = 32                 # representation size
N_CLASSES = 10
N_SAMPLES = 12             # n_test_samples (eval mode)
BN_EPS = 1e-5
LANES = 128                # lane-dense width of the packed-parameter slab


def pack_params(w1, b1, w2, b2, wh, bh):
    """One-time parameter prep (plain JAX, outside the kernel).

    * Folds the interleaved (mean, std) column split of the encoder output into
      the parameters themselves ([mean | std] concat of W2 / b2 columns).
    * Casts the large MXU operand w1 to bf16 (halves the only big DMA).
    * Packs every small parameter into one zero-padded [rows, 128] f32 slab so
      the kernel sees a single DMA instead of five sub-KB ones.
    """
    d_in, h1 = w1.shape
    z_dim, n_classes = wh.shape

    w2cat = jnp.concatenate([w2[:, 0::2], w2[:, 1::2]], axis=1)          # [H1, 2Z]
    b2cat = jnp.concatenate([b2.reshape(1, -1)[:, 0::2],
                             b2.reshape(1, -1)[:, 1::2]], axis=1)        # [1, 2Z]

    rows = ((h1 + z_dim + 3 + 7) // 8) * 8
    pslab = jnp.zeros((rows, LANES), jnp.float32)
    pslab = pslab.at[0:h1, 0:2 * z_dim].set(w2cat)                       # rows 0:H1
    pslab = pslab.at[h1:h1 + z_dim, 0:n_classes].set(wh)                 # rows H1:H1+Z
    pslab = pslab.at[h1 + z_dim, 0:h1].set(b1.reshape(-1))               # row  H1+Z
    pslab = pslab.at[h1 + z_dim + 1, 0:2 * z_dim].set(b2cat.reshape(-1))  # row H1+Z+1
    pslab = pslab.at[h1 + z_dim + 2, 0:n_classes].set(bh.reshape(-1))    # row H1+Z+2

    dims = (d_in, h1, z_dim, n_classes)
    return w1.astype(jnp.bfloat16), pslab, dims


def _make_kernel(batch, n_samples, h1, z_dim, n_classes):
    inv_bn = 1.0 / math.sqrt(1.0 + BN_EPS)
    log_s = math.log(float(n_samples))
    bs = batch * n_samples

    def kernel(x_ref, w1_ref, p_ref, eps_ref, y_ref, z_ref):
        # ---------------- packed-parameter slices (static, zero-cost views) ----
        w2 = p_ref[0:h1, 0:2 * z_dim]                                    # [H1, 2Z]
        wh = p_ref[h1:h1 + z_dim, 0:n_classes]                           # [Z, C]
        b1 = p_ref[h1 + z_dim:h1 + z_dim + 1, 0:h1]                      # [1, H1]
        b2 = p_ref[h1 + z_dim + 1:h1 + z_dim + 2, 0:2 * z_dim]           # [1, 2Z]
        bh = p_ref[h1 + z_dim + 2:h1 + z_dim + 3, 0:n_classes]           # [1, C]

        # ---------------- encoder (per batch row, BEFORE sample replication) ---
        # bf16 x bf16 MXU matmul with f32 accumulation.
        h = jnp.dot(x_ref[...], w1_ref[...],
                    preferred_element_type=jnp.float32) + b1             # [B, H1]
        h = jnp.maximum(h, 0.0)                                          # ReLU

        zss = jnp.dot(h, w2, preferred_element_type=jnp.float32) + b2    # [B, 2Z]
        zm = zss[:, :z_dim]                                              # [B, Z]
        t = zss[:, z_dim:] - 5.0
        # stable softplus(z_std_raw - 5), only B*Z transcendentals
        zs = jnp.maximum(t, 0.0) + jnp.log1p(jnp.exp(-jnp.abs(t)))       # [B, Z]

        # ---------------- replicate (mean, std) to all samples -----------------
        # One in-kernel one-hot matmul (rows are batch-major: row = b*S + s);
        # the one-hot is generated from iota so it costs no DMA.
        zmzs = jnp.concatenate([zm, zs], axis=1)                         # [B, 2Z]
        rows = jax.lax.broadcasted_iota(jnp.int32, (bs, batch), 0)
        cols = jax.lax.broadcasted_iota(jnp.int32, (bs, batch), 1)
        lo = cols * n_samples
        e_rep = jnp.logical_and(rows >= lo, rows < lo + n_samples)
        e_rep = e_rep.astype(jnp.float32)                                # [B*S, B]
        rep = jnp.dot(e_rep, zmzs, preferred_element_type=jnp.float32)   # [B*S, 2Z]

        # Reparameterized samples + BatchNorm1d (eval, affine=False, fresh stats).
        z = (rep[:, :z_dim] + rep[:, z_dim:] * eps_ref[...]) * inv_bn    # [B*S, Z]
        z_ref[...] = z

        # ---------------- V head + mean_logits ---------------------------------
        logits = jnp.dot(z, wh, preferred_element_type=jnp.float32) + bh  # [B*S, C]
        m1 = jnp.max(logits, axis=-1, keepdims=True)
        lse = m1 + jnp.log(jnp.sum(jnp.exp(logits - m1), axis=-1, keepdims=True))
        lp = logits - lse                                                # log-softmax

        # logsumexp over the sample axis with a PER-BATCH max (exactly matches
        # the reference's stable per-(b,c) logsumexp; B is a small static const).
        outs = []
        for b in range(batch):
            lp_b = lp[b * n_samples:(b + 1) * n_samples, :]              # [S, C]
            m_b = jnp.max(lp_b, axis=0, keepdims=True)                   # [1, C]
            s_b = jnp.sum(jnp.exp(lp_b - m_b), axis=0, keepdims=True)    # [1, C]
            outs.append(m_b + jnp.log(s_b) - log_s)
        y_ref[...] = jnp.concatenate(outs, axis=0)                       # [B, C]

    return kernel


def dib_forward(x_nchw, w1_bf16, pslab, dims, eps):
    """Returns (y_pred [B, n_classes], z_sample [S, B, z_dim])."""
    d_in, h1, z_dim, n_classes = dims
    batch = x_nchw.shape[0]
    n_samples = eps.shape[0]
    bs = batch * n_samples

    # glue (plain JAX, tiny): NCHW flatten + bf16 cast, batch-major eps layout.
    x_flat = x_nchw.reshape(batch, -1).astype(jnp.bfloat16)              # [B, Din]
    eps2d = jnp.transpose(eps, (1, 0, 2)).reshape(bs, z_dim)             # [B*S, Z]

    kernel = _make_kernel(batch, n_samples, h1, z_dim, n_classes)

    cost = pl.CostEstimate(
        flops=(2 * batch * d_in * h1            # encoder layer 1
               + 2 * batch * h1 * 2 * z_dim     # encoder layer 2
               + 2 * bs * batch * 2 * z_dim     # one-hot replication
               + 2 * bs * z_dim * n_classes),   # V head
        transcendentals=2 * batch * z_dim + 2 * bs * n_classes + 2 * batch * n_classes,
        bytes_accessed=(x_flat.size * 2 + w1_bf16.size * 2 + pslab.size * 4
                        + eps2d.size * 4 + batch * n_classes * 4 + bs * z_dim * 4),
    )

    # No grid: whole problem (<1 MiB) lives in VMEM for a single invocation.
    # Per the review, tiling/pipelining would only add per-step overhead here.
    y_pred, z2d = pl.pallas_call(
        kernel,
        out_shape=(
            jax.ShapeDtypeStruct((batch, n_classes), jnp.float32),
            jax.ShapeDtypeStruct((bs, z_dim), jnp.float32),
        ),
        in_specs=[pl.BlockSpec(memory_space=pltpu.MemorySpace.VMEM)] * 4,
        out_specs=(pl.BlockSpec(memory_space=pltpu.MemorySpace.VMEM),
                   pl.BlockSpec(memory_space=pltpu.MemorySpace.VMEM)),
        cost_estimate=cost,
    )(x_flat, w1_bf16, pslab, eps2d)

    z_sample = z2d.reshape(batch, n_samples, z_dim).transpose(1, 0, 2)
    return y_pred, z_sample


def dib_forward_ref(x_nchw, raw_params, eps):
    """Pure-JAX reference of the eval-mode PyTorch forward (f32 throughout)."""
    w1, b1, w2, b2, wh, bh = raw_params
    batch = x_nchw.shape[0]
    n_samples = eps.shape[0]
    x = x_nchw.reshape(batch, -1)
    h = jnp.maximum(x @ w1 + b1, 0.0)
    zss = h @ w2 + b2                                   # [B, 2*Z]
    z_mean = zss[:, 0::2]                               # .view(B,-1,2).unbind(-1)
    z_std = jax.nn.softplus(zss[:, 1::2] - 5.0)
    z = z_mean[None] + z_std[None] * eps                # rsample
    z = z / jnp.sqrt(1.0 + BN_EPS)                      # BatchNorm1d eval, affine=False
    logits = jnp.einsum("sbz,zc->sbc", z, wh) + bh[None]
    log_prob = logits - jax.scipy.special.logsumexp(logits, -1, keepdims=True)
    y = jax.scipy.special.logsumexp(log_prob, 0) - math.log(n_samples)
    return y, z


if __name__ == "__main__":
    key = jax.random.PRNGKey(0)
    ks = jax.random.split(key, 8)

    # deterministic synthetic parameters (torch-Linear-like scaling)
    w1 = jax.random.normal(ks[0], (D_IN, H1), jnp.float32) / math.sqrt(D_IN)
    b1 = jax.random.normal(ks[1], (1, H1), jnp.float32) * 0.01
    w2 = jax.random.normal(ks[2], (H1, 2 * Z_DIM), jnp.float32) / math.sqrt(H1)
    b2 = jax.random.normal(ks[3], (1, 2 * Z_DIM), jnp.float32) * 0.01
    wh = jax.random.normal(ks[4], (Z_DIM, N_CLASSES), jnp.float32) / math.sqrt(Z_DIM)
    bh = jax.random.normal(ks[5], (1, N_CLASSES), jnp.float32) * 0.01

    # one-time packing: bf16 MXU operand + single packed small-parameter slab
    w1_bf16, pslab, dims = pack_params(w1, b1, w2, b2, wh, bh)

    # deterministic inputs + reparameterization noise
    x = jax.random.normal(ks[6], (B, C_IN, H_IN, W_IN), jnp.float32)   # NCHW
    eps = jax.random.normal(ks[7], (N_SAMPLES, B, Z_DIM), jnp.float32)

    y_pred, z_sample = jax.block_until_ready(dib_forward(x, w1_bf16, pslab, dims, eps))

    # sanity check against the pure-JAX reference (kernel uses bf16 MXU inputs,
    # f32 accumulation; 2e-2 tolerance has ample headroom)
    y_ref, z_ref = dib_forward_ref(x, (w1, b1, w2, b2, wh, bh), eps)
    assert y_pred.shape == (B, N_CLASSES) and z_sample.shape == (N_SAMPLES, B, Z_DIM)
    assert bool(jnp.all(jnp.isfinite(y_pred))) and bool(jnp.all(jnp.isfinite(z_sample)))
    assert bool(jnp.allclose(y_pred, y_ref, atol=2e-2, rtol=2e-2))
    assert bool(jnp.allclose(z_sample, z_ref, atol=2e-2, rtol=2e-2))

    print("KERNEL_OK")
</pallas_src>

<mosaic_0001>
module attributes {stable_mosaic.version = 11 : i64} {
  func.func @kernel(%arg0: memref<2x1024xbf16, #tpu.memory_space<vmem>>, %arg1: memref<1024x64xbf16, #tpu.memory_space<vmem>>, %arg2: memref<104x128xf32, #tpu.memory_space<vmem>>, %arg3: memref<24x32xf32, #tpu.memory_space<vmem>>, %arg4: memref<2x10xf32, #tpu.memory_space<vmem>>, %arg5: memref<24x32xf32, #tpu.memory_space<vmem>>) attributes {dimension_semantics = [], scalar_prefetch = 0 : i64, scratch_operands = 0 : i64, tpu.core_type = #tpu.core_type<tc>} {
    %c0 = arith.constant 0 : index
    %c0_0 = arith.constant 0 : index
    %0 = vector.load %arg2[%c0, %c0_0] : memref<104x128xf32, #tpu.memory_space<vmem>>, vector<64x64xf32>
    %c64 = arith.constant 64 : index
    %c0_1 = arith.constant 0 : index
    %1 = vector.load %arg2[%c64, %c0_1] : memref<104x128xf32, #tpu.memory_space<vmem>>, vector<32x10xf32>
    %c96 = arith.constant 96 : index
    %c0_2 = arith.constant 0 : index
    %2 = vector.load %arg2[%c96, %c0_2] : memref<104x128xf32, #tpu.memory_space<vmem>>, vector<1x64xf32>
    %c97 = arith.constant 97 : index
    %c0_3 = arith.constant 0 : index
    %3 = vector.load %arg2[%c97, %c0_3] : memref<104x128xf32, #tpu.memory_space<vmem>>, vector<1x64xf32>
    %c98 = arith.constant 98 : index
    %c0_4 = arith.constant 0 : index
    %4 = vector.load %arg2[%c98, %c0_4] : memref<104x128xf32, #tpu.memory_space<vmem>>, vector<1x10xf32>
    %c0_5 = arith.constant 0 : index
    %c0_6 = arith.constant 0 : index
    %5 = vector.load %arg0[%c0_5, %c0_6] : memref<2x1024xbf16, #tpu.memory_space<vmem>>, vector<2x1024xbf16>
    %c0_7 = arith.constant 0 : index
    %c0_8 = arith.constant 0 : index
    %6 = vector.load %arg1[%c0_7, %c0_8] : memref<1024x64xbf16, #tpu.memory_space<vmem>>, vector<1024x64xbf16>
    %cst = arith.constant dense<0.000000e+00> : vector<2x64xf32>
    %7 = tpu.matmul %5, %6, %cst {dimension_numbers = #tpu.dot_dimension_numbers<[1], [0], [0], [1], [0, 0, 1, 1], [], []>} : vector<2x1024xbf16>, vector<1024x64xbf16>, vector<2x64xf32> -> vector<2x64xf32>
    %8 = vector.broadcast %2 : vector<1x64xf32> to vector<2x64xf32>
    %9 = arith.addf %7, %8 : vector<2x64xf32>
    %cst_9 = arith.constant 0.000000e+00 : f32
    %10 = vector.broadcast %cst_9 : f32 to vector<2x64xf32>
    %11 = arith.maximumf %9, %10 : vector<2x64xf32>
    %cst_10 = arith.constant dense<0.000000e+00> : vector<2x64xf32>
    %12 = tpu.matmul %11, %0, %cst_10 {dimension_numbers = #tpu.dot_dimension_numbers<[1], [0], [0], [1], [0, 0, 1, 1], [], []>} : vector<2x64xf32>, vector<64x64xf32>, vector<2x64xf32> -> vector<2x64xf32>
    %13 = vector.broadcast %3 : vector<1x64xf32> to vector<2x64xf32>
    %14 = arith.addf %12, %13 : vector<2x64xf32>
    %15 = vector.extract_strided_slice %14 {offsets = [0, 0], sizes = [2, 32], strides = [1, 1]} : vector<2x64xf32> to vector<2x32xf32>
    %16 = vector.extract_strided_slice %14 {offsets = [0, 32], sizes = [2, 32], strides = [1, 1]} : vector<2x64xf32> to vector<2x32xf32>
    %cst_11 = arith.constant 5.000000e+00 : f32
    %17 = vector.broadcast %cst_11 : f32 to vector<2x32xf32>
    %18 = arith.subf %16, %17 : vector<2x32xf32>
    %cst_12 = arith.constant 0.000000e+00 : f32
    %19 = vector.broadcast %cst_12 : f32 to vector<2x32xf32>
    %20 = arith.maximumf %18, %19 : vector<2x32xf32>
    %21 = math.absf %18 : vector<2x32xf32>
    %cst_13 = arith.constant 0.000000e+00 : f32
    %22 = vector.broadcast %cst_13 : f32 to vector<2x32xf32>
    %23 = arith.subf %22, %21 : vector<2x32xf32>
    %24 = math.exp %23 : vector<2x32xf32>
    %25 = math.log1p %24 : vector<2x32xf32>
    %26 = arith.addf %20, %25 : vector<2x32xf32>
    %27 = tpu.concatenate %15, %26 in 1 : vector<2x32xf32>, vector<2x32xf32> -> vector<2x64xf32>
    %28 = tpu.iota {dimensions = array<i32: 0>} : vector<24x2xi32>
    %29 = tpu.iota {dimensions = array<i32: 1>} : vector<24x2xi32>
    %c12_i32 = arith.constant 12 : i32
    %30 = vector.broadcast %c12_i32 : i32 to vector<24x2xi32>
    %31 = arith.muli %29, %30 : vector<24x2xi32>
    %32 = arith.cmpi sge, %28, %31 : vector<24x2xi32>
    %c12_i32_14 = arith.constant 12 : i32
    %33 = vector.broadcast %c12_i32_14 : i32 to vector<24x2xi32>
    %34 = arith.addi %31, %33 : vector<24x2xi32>
    %35 = arith.cmpi slt, %28, %34 : vector<24x2xi32>
    %36 = arith.andi %32, %35 : vector<24x2xi1>
    %37 = arith.extui %36 : vector<24x2xi1> to vector<24x2xi32>
    %38 = arith.sitofp %37 : vector<24x2xi32> to vector<24x2xf32>
    %cst_15 = arith.constant dense<0.000000e+00> : vector<24x64xf32>
    %39 = tpu.matmul %38, %27, %cst_15 {dimension_numbers = #tpu.dot_dimension_numbers<[1], [0], [0], [1], [0, 0, 1, 1], [], []>} : vector<24x2xf32>, vector<2x64xf32>, vector<24x64xf32> -> vector<24x64xf32>
    %40 = vector.extract_strided_slice %39 {offsets = [0, 0], sizes = [24, 32], strides = [1, 1]} : vector<24x64xf32> to vector<24x32xf32>
    %41 = vector.extract_strided_slice %39 {offsets = [0, 32], sizes = [24, 32], strides = [1, 1]} : vector<24x64xf32> to vector<24x32xf32>
    %c0_16 = arith.constant 0 : index
    %c0_17 = arith.constant 0 : index
    %42 = vector.load %arg3[%c0_16, %c0_17] : memref<24x32xf32, #tpu.memory_space<vmem>>, vector<24x32xf32>
    %43 = arith.mulf %41, %42 : vector<24x32xf32>
    %44 = arith.addf %40, %43 : vector<24x32xf32>
    %cst_18 = arith.constant 0.999994993 : f32
    %45 = vector.broadcast %cst_18 : f32 to vector<24x32xf32>
    %46 = arith.mulf %44, %45 : vector<24x32xf32>
    %c0_19 = arith.constant 0 : index
    %c0_20 = arith.constant 0 : index
    %47 = vector.load %arg5[%c0_19, %c0_20] : memref<24x32xf32, #tpu.memory_space<vmem>>, vector<24x32xf32>
    tpu.vector_store %arg5[%c0_19, %c0_20], %46 {strides = array<i32>} : memref<24x32xf32, #tpu.memory_space<vmem>>, vector<24x32xf32>,
    %cst_21 = arith.constant dense<0.000000e+00> : vector<24x10xf32>
    %48 = tpu.matmul %46, %1, %cst_21 {dimension_numbers = #tpu.dot_dimension_numbers<[1], [0], [0], [1], [0, 0, 1, 1], [], []>} : vector<24x32xf32>, vector<32x10xf32>, vector<24x10xf32> -> vector<24x10xf32>
    %49 = vector.broadcast %4 : vector<1x10xf32> to vector<24x10xf32>
    %50 = arith.addf %48, %49 : vector<24x10xf32>
    %cst_22 = arith.constant dense<0xFF800000> : vector<24xf32>
    %51 = vector.multi_reduction <maximumf>, %50, %cst_22 [1] : vector<24x10xf32> to vector<24xf32>
    %52 = vector.shape_cast %51 : vector<24xf32> to vector<24x1xf32>
    %53 = vector.broadcast %52 : vector<24x1xf32> to vector<24x10xf32>
    %54 = arith.subf %50, %53 : vector<24x10xf32>
    %55 = math.exp %54 : vector<24x10xf32>
    %cst_23 = arith.constant dense<0.000000e+00> : vector<24xf32>
    %56 = vector.multi_reduction <add>, %55, %cst_23 [1] : vector<24x10xf32> to vector<24xf32>
    %57 = vector.shape_cast %56 : vector<24xf32> to vector<24x1xf32>
    %58 = math.log %57 : vector<24x1xf32>
    %59 = arith.addf %52, %58 : vector<24x1xf32>
    %60 = vector.broadcast %59 : vector<24x1xf32> to vector<24x10xf32>
    %61 = arith.subf %50, %60 : vector<24x10xf32>
    %62 = vector.extract_strided_slice %61 {offsets = [0, 0], sizes = [12, 10], strides = [1, 1]} : vector<24x10xf32> to vector<12x10xf32>
    %cst_24 = arith.constant dense<0xFF800000> : vector<10xf32>
    %63 = vector.multi_reduction <maximumf>, %62, %cst_24 [0] : vector<12x10xf32> to vector<10xf32>
    %64 = vector.shape_cast %63 : vector<10xf32> to vector<1x10xf32>
    %65 = vector.broadcast %64 : vector<1x10xf32> to vector<12x10xf32>
    %66 = arith.subf %62, %65 : vector<12x10xf32>
    %67 = math.exp %66 : vector<12x10xf32>
    %cst_25 = arith.constant dense<0.000000e+00> : vector<10xf32>
    %68 = vector.multi_reduction <add>, %67, %cst_25 [0] : vector<12x10xf32> to vector<10xf32>
    %69 = vector.shape_cast %68 : vector<10xf32> to vector<1x10xf32>
    %70 = math.log %69 : vector<1x10xf32>
    %71 = arith.addf %64, %70 : vector<1x10xf32>
    %cst_26 = arith.constant 2.48490667 : f32
    %72 = vector.broadcast %cst_26 : f32 to vector<1x10xf32>
    %73 = arith.subf %71, %72 : vector<1x10xf32>
    %74 = vector.extract_strided_slice %61 {offsets = [12, 0], sizes = [12, 10], strides = [1, 1]} : vector<24x10xf32> to vector<12x10xf32>
    %cst_27 = arith.constant dense<0xFF800000> : vector<10xf32>
    %75 = vector.multi_reduction <maximumf>, %74, %cst_27 [0] : vector<12x10xf32> to vector<10xf32>
    %76 = vector.shape_cast %75 : vector<10xf32> to vector<1x10xf32>
    %77 = vector.broadcast %76 : vector<1x10xf32> to vector<12x10xf32>
    %78 = arith.subf %74, %77 : vector<12x10xf32>
    %79 = math.exp %78 : vector<12x10xf32>
    %cst_28 = arith.constant dense<0.000000e+00> : vector<10xf32>
    %80 = vector.multi_reduction <add>, %79, %cst_28 [0] : vector<12x10xf32> to vector<10xf32>
    %81 = vector.shape_cast %80 : vector<10xf32> to vector<1x10xf32>
    %82 = math.log %81 : vector<1x10xf32>
    %83 = arith.addf %76, %82 : vector<1x10xf32>
    %cst_29 = arith.constant 2.48490667 : f32
    %84 = vector.broadcast %cst_29 : f32 to vector<1x10xf32>
    %85 = arith.subf %83, %84 : vector<1x10xf32>
    %86 = tpu.concatenate %73, %85 in 0 : vector<1x10xf32>, vector<1x10xf32> -> vector<2x10xf32>
    %c0_30 = arith.constant 0 : index
    %c0_31 = arith.constant 0 : index
    %87 = vector.load %arg4[%c0_30, %c0_31] : memref<2x10xf32, #tpu.memory_space<vmem>>, vector<2x10xf32>
    tpu.vector_store %arg4[%c0_30, %c0_31], %86 {strides = array<i32>} : memref<2x10xf32, #tpu.memory_space<vmem>>, vector<2x10xf32>,
    return
  }
}

</mosaic_0001>

<llo_original>
// kernel: tpu_custom_call.1
$region0: #{tpu_custom_call.1}
  #allocation0 [shape = 'u32[]', space=smem, size = 0x4, offset = 0x4, fixed_abs, tag = 'smem constant byte address 0x4 - core index']
  #allocation1 [shape = 'u32[144,128]{1,0:T(1,128)}', space=vmem, size = 0x12000, scoped, tag = 'internal scratch']
  %s0 = inlined_call_operand.vmem [shape: bf16[2,1024], index: 0, kind: input, shape index: {}]
  %s1 = inlined_call_operand.vmem [shape: bf16[1024,64], index: 1, kind: input, shape index: {}]
  %s2 = inlined_call_operand.vmem [shape: f32[104,128], index: 2, kind: input, shape index: {}]
  %s3 = inlined_call_operand.vmem [shape: f32[24,32], index: 3, kind: input, shape index: {}]
  %s4 = inlined_call_operand.hbm [shape: f32[2,10], index: 4, kind: output, shape index: {0}]
  %s5 = inlined_call_operand.hbm [shape: f32[24,32], index: 5, kind: output, shape index: {1}]
  %6 = xla_tuple %s4, %s5
  %s7 = sld [smem:[#allocation0]]
  $region34: #{tpu_custom_call.1} parent=0
    _
  %s9 = ssub.s32 1, %s7
  %s10 = scalar_select 0, %s9, %s7
  $region1: #{tpu_custom_call.1} parent=0
    #allocation2 [shape = 'u8[1024]{0}', space=vmem, size = 0x400, scoped, tag = 'output window, operand 0, single buffered']
    #allocation3 [shape = 's32[1]{0}', space=sflag, size = 0x4, scoped, tag = 'scoped memory for tpu_custom_call.1']
    #allocation4 [shape = 'u8[12288]{0}', space=vmem, size = 0x3000, scoped, tag = 'output window, operand 1, single buffered']
    #allocation5 [shape = 's32[1]{0}', space=sflag, size = 0x4, scoped, tag = 'scoped memory for tpu_custom_call.1']
    %11 = vsyncpa [#allocation3], 0
    %12 = vsyncpa [#allocation5], 0
    // Predicated region
    $region2: #{tpu_custom_call.1} parent=1 // pred_check
      _
    $region3: #{tpu_custom_call.1} parent=1 // pred_check_branch
      %14 = sbr.rel (0) target = $region5
    $region4: #{tpu_custom_call.1} parent=1 // pred_region
      _
    $region5: #{tpu_custom_call.1} parent=1 // pred_fallthru
      _
    // Predicated region
    $region6: #{tpu_custom_call.1} parent=1 // pred_check
      _
    $region7: #{tpu_custom_call.1} parent=1 // pred_check_branch
      %16 = sbr.rel (0) target = $region9
    $region8: #{tpu_custom_call.1} parent=1 // pred_region
      _
    $region9: #{tpu_custom_call.1} parent=1 // pred_fallthru
      _
    // Predicated region
    $region10: #{tpu_custom_call.1} parent=1 // pred_check
      _
    $region11: #{tpu_custom_call.1} parent=1 // pred_check_branch
      %18 = sbr.rel (0) target = $region13
    $region12: #{tpu_custom_call.1} parent=1 // pred_region
      _
    $region13: #{tpu_custom_call.1} parent=1 // pred_fallthru
      _
    // Predicated region
    $region14: #{tpu_custom_call.1} parent=1 // pred_check
      _
    $region15: #{tpu_custom_call.1} parent=1 // pred_check_branch
      %20 = sbr.rel (0) target = $region17
    $region16: #{tpu_custom_call.1} parent=1 // pred_region
      _
    $region17: #{tpu_custom_call.1} parent=1 // pred_fallthru
      _
    %v22 = vld [vmem:[%s2] sm:$0xff]
    %v23 = vld [vmem:[%s2 + $0x8] sm:$0xff]
    %v24 = vld [vmem:[%s2 + $0x10] sm:$0xff]
    %v25 = vld [vmem:[%s2 + $0x18] sm:$0xff]
    %v26 = vld [vmem:[%s2 + $0x20] sm:$0xff]
    %v27 = vld [vmem:[%s2 + $0x28] sm:$0xff]
    %v28 = vld [vmem:[%s2 + $0x30] sm:$0xff]
    %v29 = vld [vmem:[%s2 + $0x38] sm:$0xff]
    %v30 = vld [vmem:[%s2 + $0x40] sm:$0xff]
    %v31 = vld [vmem:[%s2 + $0x48] sm:$0xff]
    %v32 = vld [vmem:[%s2 + $0x50] sm:$0xff]
    %v33 = vld [vmem:[%s2 + $0x58] sm:$0xff]
    %v34 = vld [vmem:[%s2 + $0x60] sm:$0x1]
    %v35 = vld [vmem:[%s2 + $0x61] sm:$0x1]
    %v36 = vld [vmem:[%s2 + $0x62] sm:$0x1]
    %v37 = vld [vmem:[%s0] sm:$0xff]
    %v38 = vld [vmem:[%s1] sm:$0xf]
    %v39 = vld [vmem:[%s1 + $0x4] sm:$0xf]
    %v40 = vld [vmem:[%s1 + $0x8] sm:$0xf]
    %v41 = vld [vmem:[%s1 + $0xc] sm:$0xf]
    %v42 = vld [vmem:[%s1 + $0x10] sm:$0xf]
    %v43 = vld [vmem:[%s1 + $0x14] sm:$0xf]
    %v44 = vld [vmem:[%s1 + $0x18] sm:$0xf]
    %v45 = vld [vmem:[%s1 + $0x1c] sm:$0xf]
    %v46 = vld [vmem:[%s1 + $0x20] sm:$0xf]
    %v47 = vld [vmem:[%s1 + $0x24] sm:$0xf]
    %v48 = vld [vmem:[%s1 + $0x28] sm:$0xf]
    %v49 = vld [vmem:[%s1 + $0x2c] sm:$0xf]
    %v50 = vld [vmem:[%s1 + $0x30] sm:$0xf]
    %v51 = vld [vmem:[%s1 + $0x34] sm:$0xf]
    %v52 = vld [vmem:[%s1 + $0x38] sm:$0xf]
    %v53 = vld [vmem:[%s1 + $0x3c] sm:$0xf]
    %v54 = vld [vmem:[%s1 + $0x40] sm:$0xf]
    %v55 = vld [vmem:[%s1 + $0x44] sm:$0xf]
    %v56 = vld [vmem:[%s1 + $0x48] sm:$0xf]
    %v57 = vld [vmem:[%s1 + $0x4c] sm:$0xf]
    %v58 = vld [vmem:[%s1 + $0x50] sm:$0xf]
    %v59 = vld [vmem:[%s1 + $0x54] sm:$0xf]
    %v60 = vld [vmem:[%s1 + $0x58] sm:$0xf]
    %v61 = vld [vmem:[%s1 + $0x5c] sm:$0xf]
    %v62 = vld [vmem:[%s1 + $0x60] sm:$0xf]
    %v63 = vld [vmem:[%s1 + $0x64] sm:$0xf]
    %v64 = vld [vmem:[%s1 + $0x68] sm:$0xf]
    %v65 = vld [vmem:[%s1 + $0x6c] sm:$0xf]
    %v66 = vld [vmem:[%s1 + $0x70] sm:$0xf]
    %v67 = vld [vmem:[%s1 + $0x74] sm:$0xf]
    %v68 = vld [vmem:[%s1 + $0x78] sm:$0xf]
    %v69 = vld [vmem:[%s1 + $0x7c] sm:$0xf]
    %v70 = vld [vmem:[%s1 + $0x80] sm:$0xf]
    %v71 = vld [vmem:[%s1 + $0x84] sm:$0xf]
    %v72 = vld [vmem:[%s1 + $0x88] sm:$0xf]
    %v73 = vld [vmem:[%s1 + $0x8c] sm:$0xf]
    %v74 = vld [vmem:[%s1 + $0x90] sm:$0xf]
    %v75 = vld [vmem:[%s1 + $0x94] sm:$0xf]
    %v76 = vld [vmem:[%s1 + $0x98] sm:$0xf]
    %v77 = vld [vmem:[%s1 + $0x9c] sm:$0xf]
    %v78 = vld [vmem:[%s1 + $0xa0] sm:$0xf]
    %v79 = vld [vmem:[%s1 + $0xa4] sm:$0xf]
    %v80 = vld [vmem:[%s1 + $0xa8] sm:$0xf]
    %v81 = vld [vmem:[%s1 + $0xac] sm:$0xf]
    %v82 = vld [vmem:[%s1 + $0xb0] sm:$0xf]
    %v83 = vld [vmem:[%s1 + $0xb4] sm:$0xf]
    %v84 = vld [vmem:[%s1 + $0xb8] sm:$0xf]
    %v85 = vld [vmem:[%s1 + $0xbc] sm:$0xf]
    %v86 = vld [vmem:[%s1 + $0xc0] sm:$0xf]
    %v87 = vld [vmem:[%s1 + $0xc4] sm:$0xf]
    %v88 = vld [vmem:[%s1 + $0xc8] sm:$0xf]
    %v89 = vld [vmem:[%s1 + $0xcc] sm:$0xf]
    %v90 = vld [vmem:[%s1 + $0xd0] sm:$0xf]
    %v91 = vld [vmem:[%s1 + $0xd4] sm:$0xf]
    %v92 = vld [vmem:[%s1 + $0xd8] sm:$0xf]
    %v93 = vld [vmem:[%s1 + $0xdc] sm:$0xf]
    %v94 = vld [vmem:[%s1 + $0xe0] sm:$0xf]
    %v95 = vld [vmem:[%s1 + $0xe4] sm:$0xf]
    %v96 = vld [vmem:[%s1 + $0xe8] sm:$0xf]
    %v97 = vld [vmem:[%s1 + $0xec] sm:$0xf]
    %v98 = vld [vmem:[%s1 + $0xf0] sm:$0xf]
    %v99 = vld [vmem:[%s1 + $0xf4] sm:$0xf]
    %v100 = vld [vmem:[%s1 + $0xf8] sm:$0xf]
    %v101 = vld [vmem:[%s1 + $0xfc] sm:$0xf]
    %v102 = vld [vmem:[%s1 + $0x100] sm:$0xf]
    %v103 = vld [vmem:[%s1 + $0x104] sm:$0xf]
    %v104 = vld [vmem:[%s1 + $0x108] sm:$0xf]
    %v105 = vld [vmem:[%s1 + $0x10c] sm:$0xf]
    %v106 = vld [vmem:[%s1 + $0x110] sm:$0xf]
    %v107 = vld [vmem:[%s1 + $0x114] sm:$0xf]
    %v108 = vld [vmem:[%s1 + $0x118] sm:$0xf]
    %v109 = vld [vmem:[%s1 + $0x11c] sm:$0xf]
    %v110 = vld [vmem:[%s1 + $0x120] sm:$0xf]
    %v111 = vld [vmem:[%s1 + $0x124] sm:$0xf]
    %v112 = vld [vmem:[%s1 + $0x128] sm:$0xf]
    %v113 = vld [vmem:[%s1 + $0x12c] sm:$0xf]
    %v114 = vld [vmem:[%s1 + $0x130] sm:$0xf]
    %v115 = vld [vmem:[%s1 + $0x134] sm:$0xf]
    %v116 = vld [vmem:[%s1 + $0x138] sm:$0xf]
    %v117 = vld [vmem:[%s1 + $0x13c] sm:$0xf]
    %v118 = vld [vmem:[%s1 + $0x140] sm:$0xf]
    %v119 = vld [vmem:[%s1 + $0x144] sm:$0xf]
    %v120 = vld [vmem:[%s1 + $0x148] sm:$0xf]
    %v121 = vld [vmem:[%s1 + $0x14c] sm:$0xf]
    %v122 = vld [vmem:[%s1 + $0x150] sm:$0xf]
    %v123 = vld [vmem:[%s1 + $0x154] sm:$0xf]
    %v124 = vld [vmem:[%s1 + $0x158] sm:$0xf]
    %v125 = vld [vmem:[%s1 + $0x15c] sm:$0xf]
    %v126 = vld [vmem:[%s1 + $0x160] sm:$0xf]
    %v127 = vld [vmem:[%s1 + $0x164] sm:$0xf]
    %v128 = vld [vmem:[%s1 + $0x168] sm:$0xf]
    %v129 = vld [vmem:[%s1 + $0x16c] sm:$0xf]
    %v130 = vld [vmem:[%s1 + $0x170] sm:$0xf]
    %v131 = vld [vmem:[%s1 + $0x174] sm:$0xf]
    %v132 = vld [vmem:[%s1 + $0x178] sm:$0xf]
    %v133 = vld [vmem:[%s1 + $0x17c] sm:$0xf]
    %v134 = vld [vmem:[%s1 + $0x180] sm:$0xf]
    %v135 = vld [vmem:[%s1 + $0x184] sm:$0xf]
    %v136 = vld [vmem:[%s1 + $0x188] sm:$0xf]
    %v137 = vld [vmem:[%s1 + $0x18c] sm:$0xf]
    %v138 = vld [vmem:[%s1 + $0x190] sm:$0xf]
    %v139 = vld [vmem:[%s1 + $0x194] sm:$0xf]
    %v140 = vld [vmem:[%s1 + $0x198] sm:$0xf]
    %v141 = vld [vmem:[%s1 + $0x19c] sm:$0xf]
    %v142 = vld [vmem:[%s1 + $0x1a0] sm:$0xf]
    %v143 = vld [vmem:[%s1 + $0x1a4] sm:$0xf]
    %v144 = vld [vmem:[%s1 + $0x1a8] sm:$0xf]
    %v145 = vld [vmem:[%s1 + $0x1ac] sm:$0xf]
    %v146 = vld [vmem:[%s1 + $0x1b0] sm:$0xf]
    %v147 = vld [vmem:[%s1 + $0x1b4] sm:$0xf]
    %v148 = vld [vmem:[%s1 + $0x1b8] sm:$0xf]
    %v149 = vld [vmem:[%s1 + $0x1bc] sm:$0xf]
    %v150 = vld [vmem:[%s1 + $0x1c0] sm:$0xf]
    %v151 = vld [vmem:[%s1 + $0x1c4] sm:$0xf]
    %v152 = vld [vmem:[%s1 + $0x1c8] sm:$0xf]
    %v153 = vld [vmem:[%s1 + $0x1cc] sm:$0xf]
    %v154 = vld [vmem:[%s1 + $0x1d0] sm:$0xf]
    %v155 = vld [vmem:[%s1 + $0x1d4] sm:$0xf]
    %v156 = vld [vmem:[%s1 + $0x1d8] sm:$0xf]
    %v157 = vld [vmem:[%s1 + $0x1dc] sm:$0xf]
    %v158 = vld [vmem:[%s1 + $0x1e0] sm:$0xf]
    %v159 = vld [vmem:[%s1 + $0x1e4] sm:$0xf]
    %v160 = vld [vmem:[%s1 + $0x1e8] sm:$0xf]
    %v161 = vld [vmem:[%s1 + $0x1ec] sm:$0xf]
    %v162 = vld [vmem:[%s1 + $0x1f0] sm:$0xf]
    %v163 = vld [vmem:[%s1 + $0x1f4] sm:$0xf]
    %v164 = vld [vmem:[%s1 + $0x1f8] sm:$0xf]
    %v165 = vld [vmem:[%s1 + $0x1fc] sm:$0xf]
    %v166 = vlaneseq
    %v167 = vshrl.u32 %v166, 7
    %v168 = vsub.s32 0, %v167
    %v169 = vrot.slane %v34, %v168
    %v171 = vcombine.high %v37, %v37
    %v173 = vunpack.c.l.s4 1966171168
    %v174 = vunpack.c.0.s8 %v173
    %v175 = vlaneseq
    %v176 = vshrl.u32 %v175, 7
    %v177 = vsub.s32 %v174, %v176
    %v178 = vrot.slane %v37, %v177
    %v180 = vunpack.c.l.s4 1966171168
    %v181 = vunpack.c.0.s8 %v180
    %v182 = vlaneseq
    %v183 = vshrl.u32 %v182, 7
    %v184 = vsub.s32 %v181, %v183
    %v185 = vrot.slane %v171, %v184
    %v186 = vcombine.high %v178, %v178
    %v187 = vcombine.high %v185, %v185
    %v189 = vunpack.c.l.s4 1966171168
    %v190 = vunpack.c.0.s8 %v189
    %v191 = vlaneseq
    %v192 = vshrl.u32 %v191, 7
    %v193 = vsub.s32 %v190, %v192
    %v194 = vrot.slane %v178, %v193
    %v196 = vunpack.c.l.s4 1966171168
    %v197 = vunpack.c.0.s8 %v196
    %v198 = vlaneseq
    %v199 = vshrl.u32 %v198, 7
    %v200 = vsub.s32 %v197, %v199
    %v201 = vrot.slane %v185, %v200
    %v203 = vunpack.c.l.s4 1966171168
    %v204 = vunpack.c.0.s8 %v203
    %v205 = vlaneseq
    %v206 = vshrl.u32 %v205, 7
    %v207 = vsub.s32 %v204, %v206
    %v208 = vrot.slane %v186, %v207
    %v210 = vunpack.c.l.s4 1966171168
    %v211 = vunpack.c.0.s8 %v210
    %v212 = vlaneseq
    %v213 = vshrl.u32 %v212, 7
    %v214 = vsub.s32 %v211, %v213
    %v215 = vrot.slane %v187, %v214
    %v216 = vcombine.high %v194, %v194
    %v217 = vcombine.high %v201, %v201
    %v218 = vcombine.high %v208, %v208
    %v219 = vcombine.high %v215, %v215
    %v356 = vunpack.c.l.b16 %v38
    %v357 = vunpack.c.l.b16 %v39
    %v358 = vunpack.c.l.b16 %v40
    %v359 = vunpack.c.l.b16 %v41
    %v360 = vunpack.c.l.b16 %v42
    %v361 = vunpack.c.l.b16 %v43
    %v362 = vunpack.c.l.b16 %v44
    %v363 = vunpack.c.l.b16 %v45
    %v364 = vunpack.c.l.b16 %v46
    %v365 = vunpack.c.l.b16 %v47
    %v366 = vunpack.c.l.b16 %v48
    %v367 = vunpack.c.l.b16 %v49
    %v368 = vunpack.c.l.b16 %v50
    %v369 = vunpack.c.l.b16 %v51
    %v370 = vunpack.c.l.b16 %v52
    %v371 = vunpack.c.l.b16 %v53
    %v372 = vunpack.c.l.b16 %v54
    %v373 = vunpack.c.l.b16 %v55
    %v374 = vunpack.c.l.b16 %v56
    %v375 = vunpack.c.l.b16 %v57
    %v376 = vunpack.c.l.b16 %v58
    %v377 = vunpack.c.l.b16 %v59
    %v378 = vunpack.c.l.b16 %v60
    %v379 = vunpack.c.l.b16 %v61
    %v380 = vunpack.c.l.b16 %v62
    %v381 = vunpack.c.l.b16 %v63
    %v382 = vunpack.c.l.b16 %v64
    %v383 = vunpack.c.l.b16 %v65
    %v384 = vunpack.c.l.b16 %v66
    %v385 = vunpack.c.l.b16 %v67
    %v386 = vunpack.c.l.b16 %v68
    %v387 = vunpack.c.l.b16 %v69
    %v388 = vunpack.c.l.b16 %v70
    %v389 = vunpack.c.l.b16 %v71
    %v390 = vunpack.c.l.b16 %v72
    %v391 = vunpack.c.l.b16 %v73
    %v392 = vunpack.c.l.b16 %v74
    %v393 = vunpack.c.l.b16 %v75
    %v394 = vunpack.c.l.b16 %v76
    %v395 = vunpack.c.l.b16 %v77
    %v396 = vunpack.c.l.b16 %v78
    %v397 = vunpack.c.l.b16 %v79
    %v398 = vunpack.c.l.b16 %v80
    %v399 = vunpack.c.l.b16 %v81
    %v400 = vunpack.c.l.b16 %v82
    %v401 = vunpack.c.l.b16 %v83
    %v402 = vunpack.c.l.b16 %v84
    %v403 = vunpack.c.l.b16 %v85
    %v404 = vunpack.c.l.b16 %v86
    %v405 = vunpack.c.l.b16 %v87
    %v406 = vunpack.c.l.b16 %v88
    %v407 = vunpack.c.l.b16 %v89
    %v408 = vunpack.c.l.b16 %v90
    %v409 = vunpack.c.l.b16 %v91
    %v410 = vunpack.c.l.b16 %v92
    %v411 = vunpack.c.l.b16 %v93
    %v412 = vunpack.c.l.b16 %v94
    %v413 = vunpack.c.l.b16 %v95
    %v414 = vunpack.c.l.b16 %v96
    %v415 = vunpack.c.l.b16 %v97
    %v416 = vunpack.c.l.b16 %v98
    %v417 = vunpack.c.l.b16 %v99
    %v418 = vunpack.c.l.b16 %v100
    %v419 = vunpack.c.l.b16 %v101
    %v420 = vunpack.c.l.b16 %v102
    %v421 = vunpack.c.l.b16 %v103
    %v422 = vunpack.c.l.b16 %v104
    %v423 = vunpack.c.l.b16 %v105
    %v424 = vunpack.c.l.b16 %v106
    %v425 = vunpack.c.l.b16 %v107
    %v426 = vunpack.c.l.b16 %v108
    %v427 = vunpack.c.l.b16 %v109
    %v428 = vunpack.c.l.b16 %v110
    %v429 = vunpack.c.l.b16 %v111
    %v430 = vunpack.c.l.b16 %v112
    %v431 = vunpack.c.l.b16 %v113
    %v432 = vunpack.c.l.b16 %v114
    %v433 = vunpack.c.l.b16 %v115
    %v434 = vunpack.c.l.b16 %v116
    %v435 = vunpack.c.l.b16 %v117
    %v436 = vunpack.c.l.b16 %v118
    %v437 = vunpack.c.l.b16 %v119
    %v438 = vunpack.c.l.b16 %v120
    %v439 = vunpack.c.l.b16 %v121
    %v440 = vunpack.c.l.b16 %v122
    %v441 = vunpack.c.l.b16 %v123
    %v442 = vunpack.c.l.b16 %v124
    %v443 = vunpack.c.l.b16 %v125
    %v444 = vunpack.c.l.b16 %v126
    %v445 = vunpack.c.l.b16 %v127
    %v446 = vunpack.c.l.b16 %v128
    %v447 = vunpack.c.l.b16 %v129
    %v448 = vunpack.c.l.b16 %v130
    %v449 = vunpack.c.l.b16 %v131
    %v450 = vunpack.c.l.b16 %v132
    %v451 = vunpack.c.l.b16 %v133
    %v452 = vunpack.c.l.b16 %v134
    %v453 = vunpack.c.l.b16 %v135
    %v454 = vunpack.c.l.b16 %v136
    %v455 = vunpack.c.l.b16 %v137
    %v456 = vunpack.c.l.b16 %v138
    %v457 = vunpack.c.l.b16 %v139
    %v458 = vunpack.c.l.b16 %v140
    %v459 = vunpack.c.l.b16 %v141
    %v460 = vunpack.c.l.b16 %v142
    %v461 = vunpack.c.l.b16 %v143
    %v462 = vunpack.c.l.b16 %v144
    %v463 = vunpack.c.l.b16 %v145
    %v464 = vunpack.c.l.b16 %v146
    %v465 = vunpack.c.l.b16 %v147
    %v466 = vunpack.c.l.b16 %v148
    %v467 = vunpack.c.l.b16 %v149
    %v468 = vunpack.c.l.b16 %v150
    %v469 = vunpack.c.l.b16 %v151
    %v470 = vunpack.c.l.b16 %v152
    %v471 = vunpack.c.l.b16 %v153
    %v472 = vunpack.c.l.b16 %v154
    %v473 = vunpack.c.l.b16 %v155
    %v474 = vunpack.c.l.b16 %v156
    %v475 = vunpack.c.l.b16 %v157
    %v476 = vunpack.c.l.b16 %v158
    %v477 = vunpack.c.l.b16 %v159
    %v478 = vunpack.c.l.b16 %v160
    %v479 = vunpack.c.l.b16 %v161
    %v480 = vunpack.c.l.b16 %v162
    %v481 = vunpack.c.l.b16 %v163
    %v482 = vunpack.c.l.b16 %v164
    %v483 = vunpack.c.l.b16 %v165
    %v484 = vpack.c.b16 %v357, %v356
    %v485 = vpack.c.b16 %v359, %v358
    %v486 = vpack.c.b16 %v361, %v360
    %v487 = vpack.c.b16 %v363, %v362
    %v488 = vpack.c.b16 %v365, %v364
    %v489 = vpack.c.b16 %v367, %v366
    %v490 = vpack.c.b16 %v369, %v368
    %v491 = vpack.c.b16 %v371, %v370
    %v492 = vpack.c.b16 %v373, %v372
    %v493 = vpack.c.b16 %v375, %v374
    %v494 = vpack.c.b16 %v377, %v376
    %v495 = vpack.c.b16 %v379, %v378
    %v496 = vpack.c.b16 %v381, %v380
    %v497 = vpack.c.b16 %v383, %v382
    %v498 = vpack.c.b16 %v385, %v384
    %v499 = vpack.c.b16 %v387, %v386
    %v500 = vpack.c.b16 %v389, %v388
    %v501 = vpack.c.b16 %v391, %v390
    %v502 = vpack.c.b16 %v393, %v392
    %v503 = vpack.c.b16 %v395, %v394
    %v504 = vpack.c.b16 %v397, %v396
    %v505 = vpack.c.b16 %v399, %v398
    %v506 = vpack.c.b16 %v401, %v400
    %v507 = vpack.c.b16 %v403, %v402
    %v508 = vpack.c.b16 %v405, %v404
    %v509 = vpack.c.b16 %v407, %v406
    %v510 = vpack.c.b16 %v409, %v408
    %v511 = vpack.c.b16 %v411, %v410
    %v512 = vpack.c.b16 %v413, %v412
    %v513 = vpack.c.b16 %v415, %v414
    %v514 = vpack.c.b16 %v417, %v416
    %v515 = vpack.c.b16 %v419, %v418
    %v516 = vpack.c.b16 %v421, %v420
    %v517 = vpack.c.b16 %v423, %v422
    %v518 = vpack.c.b16 %v425, %v424
    %v519 = vpack.c.b16 %v427, %v426
    %v520 = vpack.c.b16 %v429, %v428
    %v521 = vpack.c.b16 %v431, %v430
    %v522 = vpack.c.b16 %v433, %v432
    %v523 = vpack.c.b16 %v435, %v434
    %v524 = vpack.c.b16 %v437, %v436
    %v525 = vpack.c.b16 %v439, %v438
    %v526 = vpack.c.b16 %v441, %v440
    %v527 = vpack.c.b16 %v443, %v442
    %v528 = vpack.c.b16 %v445, %v444
    %v529 = vpack.c.b16 %v447, %v446
    %v530 = vpack.c.b16 %v449, %v448
    %v531 = vpack.c.b16 %v451, %v450
    %v532 = vpack.c.b16 %v453, %v452
    %v533 = vpack.c.b16 %v455, %v454
    %v534 = vpack.c.b16 %v457, %v456
    %v535 = vpack.c.b16 %v459, %v458
    %v536 = vpack.c.b16 %v461, %v460
    %v537 = vpack.c.b16 %v463, %v462
    %v538 = vpack.c.b16 %v465, %v464
    %v539 = vpack.c.b16 %v467, %v466
    %v540 = vpack.c.b16 %v469, %v468
    %v541 = vpack.c.b16 %v471, %v470
    %v542 = vpack.c.b16 %v473, %v472
    %v543 = vpack.c.b16 %v475, %v474
    %v544 = vpack.c.b16 %v477, %v476
    %v545 = vpack.c.b16 %v479, %v478
    %v546 = vpack.c.b16 %v481, %v480
    %v547 = vpack.c.b16 %v483, %v482
    %612 = vmatprep.subr.bf16.mxu0 0
    %613 = vmatpush1.bf16.msra.mxu0 %v491
    %614 = vmatprep.subr.bf16.mxu0 0
    %615 = vmatpush1.bf16.msra.mxu0 %v490
    %616 = vmatprep.subr.bf16.mxu0 0
    %617 = vmatpush1.bf16.msra.mxu0 %v489
    %618 = vmatprep.subr.bf16.mxu0 0
    %619 = vmatpush1.bf16.msra.mxu0 %v488
    %620 = vmatprep.subr.bf16.mxu0 0
    %621 = vmatpush1.bf16.msra.mxu0 %v487
    %622 = vmatprep.subr.bf16.mxu0 0
    %623 = vmatpush1.bf16.msra.mxu0 %v486
    %624 = vmatprep.subr.bf16.mxu0 0
    %625 = vmatpush1.bf16.msra.mxu0 %v485
    %626 = vmatprep.subr.bf16.mxu0 0
    %627 = vmatpush1.bf16.msra.mxu0 %v484
    %628 = vmatprep.subr.bf16.mxu0 0
    %629 = vmatpush2.bf16.msra.mxu0 %v499
    %630 = vmatprep.subr.bf16.mxu0 0
    %631 = vmatpush2.bf16.msra.mxu0 %v498
    %632 = vmatprep.subr.bf16.mxu0 0
    %633 = vmatpush2.bf16.msra.mxu0 %v497
    %634 = vmatprep.subr.bf16.mxu0 0
    %635 = vmatpush2.bf16.msra.mxu0 %v496
    %636 = vmatprep.subr.bf16.mxu0 0
    %637 = vmatpush2.bf16.msra.mxu0 %v495
    %638 = vmatprep.subr.bf16.mxu0 0
    %639 = vmatpush2.bf16.msra.mxu0 %v494
    %640 = vmatprep.subr.bf16.mxu0 0
    %641 = vmatpush2.bf16.msra.mxu0 %v493
    %642 = vmatprep.subr.bf16.mxu0 0
    %643 = vmatpush2.bf16.msra.mxu0 %v492
    %644 = vmatprep.mubr.bf16.mxu0 %v208
    %645 = vmatmul.mubr.bf16.gmra.mxu0 %v194
    %v646 = vpop.f32.mrf.mxu0
    %v647 = vadd.f32 %v169, %v646
    %v648 = vpop.f32.mrf.mxu0
    %v649 = vpop.f32.mrf.mxu0
    %v650 = vpop.f32.mrf.mxu0
    %651 = vdwg.mxu0
    %652 = vmatprep.subr.bf16.mxu0 0
    %653 = vmatpush1.bf16.msra.mxu0 %v507
    %654 = vmatprep.subr.bf16.mxu0 0
    %655 = vmatpush1.bf16.msra.mxu0 %v506
    %656 = vmatprep.subr.bf16.mxu0 0
    %657 = vmatpush1.bf16.msra.mxu0 %v505
    %658 = vmatprep.subr.bf16.mxu0 0
    %659 = vmatpush1.bf16.msra.mxu0 %v504
    %660 = vmatprep.subr.bf16.mxu0 0
    %661 = vmatpush1.bf16.msra.mxu0 %v503
    %662 = vmatprep.subr.bf16.mxu0 0
    %663 = vmatpush1.bf16.msra.mxu0 %v502
    %664 = vmatprep.subr.bf16.mxu0 0
    %665 = vmatpush1.bf16.msra.mxu0 %v501
    %666 = vmatprep.subr.bf16.mxu0 0
    %667 = vmatpush1.bf16.msra.mxu0 %v500
    %668 = vmatprep.subr.bf16.mxu0 0
    %669 = vmatpush2.bf16.msra.mxu0 %v515
    %670 = vmatprep.subr.bf16.mxu0 0
    %671 = vmatpush2.bf16.msra.mxu0 %v514
    %672 = vmatprep.subr.bf16.mxu0 0
    %673 = vmatpush2.bf16.msra.mxu0 %v513
    %674 = vmatprep.subr.bf16.mxu0 0
    %675 = vmatpush2.bf16.msra.mxu0 %v512
    %676 = vmatprep.subr.bf16.mxu0 0
    %677 = vmatpush2.bf16.msra.mxu0 %v511
    %678 = vmatprep.subr.bf16.mxu0 0
    %679 = vmatpush2.bf16.msra.mxu0 %v510
    %680 = vmatprep.subr.bf16.mxu0 0
    %681 = vmatpush2.bf16.msra.mxu0 %v509
    %682 = vmatprep.subr.bf16.mxu0 0
    %683 = vmatpush2.bf16.msra.mxu0 %v508
    %684 = vmatprep.mubr.bf16.mxu0 %v218
    %685 = vmatmul.mubr.bf16.gmra.mxu0 %v216
    %v686 = vpop.f32.mrf.mxu0
    %v687 = vadd.f32 %v647, %v686
    %v688 = vpop.f32.mrf.mxu0
    %v689 = vpop.f32.mrf.mxu0
    %v690 = vpop.f32.mrf.mxu0
    %691 = vdwg.mxu0
    %692 = vmatprep.subr.bf16.mxu0 0
    %693 = vmatpush1.bf16.msra.mxu0 %v523
    %694 = vmatprep.subr.bf16.mxu0 0
    %695 = vmatpush1.bf16.msra.mxu0 %v522
    %696 = vmatprep.subr.bf16.mxu0 0
    %697 = vmatpush1.bf16.msra.mxu0 %v521
    %698 = vmatprep.subr.bf16.mxu0 0
    %699 = vmatpush1.bf16.msra.mxu0 %v520
    %700 = vmatprep.subr.bf16.mxu0 0
    %701 = vmatpush1.bf16.msra.mxu0 %v519
    %702 = vmatprep.subr.bf16.mxu0 0
    %703 = vmatpush1.bf16.msra.mxu0 %v518
    %704 = vmatprep.subr.bf16.mxu0 0
    %705 = vmatpush1.bf16.msra.mxu0 %v517
    %706 = vmatprep.subr.bf16.mxu0 0
    %707 = vmatpush1.bf16.msra.mxu0 %v516
    %708 = vmatprep.subr.bf16.mxu0 0
    %709 = vmatpush2.bf16.msra.mxu0 %v531
    %710 = vmatprep.subr.bf16.mxu0 0
    %711 = vmatpush2.bf16.msra.mxu0 %v530
    %712 = vmatprep.subr.bf16.mxu0 0
    %713 = vmatpush2.bf16.msra.mxu0 %v529
    %714 = vmatprep.subr.bf16.mxu0 0
    %715 = vmatpush2.bf16.msra.mxu0 %v528
    %716 = vmatprep.subr.bf16.mxu0 0
    %717 = vmatpush2.bf16.msra.mxu0 %v527
    %718 = vmatprep.subr.bf16.mxu0 0
    %719 = vmatpush2.bf16.msra.mxu0 %v526
    %720 = vmatprep.subr.bf16.mxu0 0
    %721 = vmatpush2.bf16.msra.mxu0 %v525
    %722 = vmatprep.subr.bf16.mxu0 0
    %723 = vmatpush2.bf16.msra.mxu0 %v524
    %724 = vmatprep.mubr.bf16.mxu0 %v215
    %725 = vmatmul.mubr.bf16.gmra.mxu0 %v201
    %v726 = vpop.f32.mrf.mxu0
    %v727 = vadd.f32 %v687, %v726
    %v728 = vpop.f32.mrf.mxu0
    %v729 = vpop.f32.mrf.mxu0
    %v730 = vpop.f32.mrf.mxu0
    %731 = vdwg.mxu0
    %732 = vmatprep.subr.bf16.mxu0 0
    %733 = vmatpush1.bf16.msra.mxu0 %v539
    %734 = vmatprep.subr.bf16.mxu0 0
    %735 = vmatpush1.bf16.msra.mxu0 %v538
    %736 = vmatprep.subr.bf16.mxu0 0
    %737 = vmatpush1.bf16.msra.mxu0 %v537
    %738 = vmatprep.subr.bf16.mxu0 0
    %739 = vmatpush1.bf16.msra.mxu0 %v536
    %740 = vmatprep.subr.bf16.mxu0 0
    %741 = vmatpush1.bf16.msra.mxu0 %v535
    %742 = vmatprep.subr.bf16.mxu0 0
    %743 = vmatpush1.bf16.msra.mxu0 %v534
    %744 = vmatprep.subr.bf16.mxu0 0
    %745 = vmatpush1.bf16.msra.mxu0 %v533
    %746 = vmatprep.subr.bf16.mxu0 0
    %747 = vmatpush1.bf16.msra.mxu0 %v532
    %748 = vmatprep.subr.bf16.mxu0 0
    %749 = vmatpush2.bf16.msra.mxu0 %v547
    %750 = vmatprep.subr.bf16.mxu0 0
    %751 = vmatpush2.bf16.msra.mxu0 %v546
    %752 = vmatprep.subr.bf16.mxu0 0
    %753 = vmatpush2.bf16.msra.mxu0 %v545
    %754 = vmatprep.subr.bf16.mxu0 0
    %755 = vmatpush2.bf16.msra.mxu0 %v544
    %756 = vmatprep.subr.bf16.mxu0 0
    %757 = vmatpush2.bf16.msra.mxu0 %v543
    %758 = vmatprep.subr.bf16.mxu0 0
    %759 = vmatpush2.bf16.msra.mxu0 %v542
    %760 = vmatprep.subr.bf16.mxu0 0
    %761 = vmatpush2.bf16.msra.mxu0 %v541
    %762 = vmatprep.subr.bf16.mxu0 0
    %763 = vmatpush2.bf16.msra.mxu0 %v540
    %764 = vmatprep.mubr.bf16.mxu0 %v219
    %765 = vmatmul.mubr.bf16.gmra.mxu0 %v217
    %v766 = vpop.f32.mrf.mxu0
    %v767 = vadd.f32 %v727, %v766
    %v768 = vpop.f32.mrf.mxu0
    %v769 = vpop.f32.mrf.mxu0
    %v770 = vpop.f32.mrf.mxu0
    %771 = vdwg.mxu0
    %v772 = vmax.f32 %v767, 0.0
    %v773 = vlaneseq
    %v774 = vshrl.u32 %v773, 7
    %v775 = vsub.s32 0, %v774
    %v776 = vrot.slane %v35, %v775
    %vm777 = vcmask 523264
    %v779 = vsel %vm777, %v772, 0
    %781 = vmatprep.subr.mxu0 0.0
    %782 = vmatpush1.msra.mxu0 0.0
    %783 = vmatprep.subr.mxu0 0.0
    %784 = vmatpush1.msra.mxu0 0.0
    %785 = vmatprep.subr.mxu0 0.0
    %786 = vmatpush1.msra.mxu0 0.0
    %787 = vmatprep.subr.mxu0 0.0
    %788 = vmatpush1.msra.mxu0 0.0
    %789 = vmatprep.subr.mxu0 0.0
    %790 = vmatpush1.msra.mxu0 0.0
    %791 = vmatprep.subr.mxu0 0.0
    %792 = vmatpush1.msra.mxu0 0.0
    %793 = vmatprep.subr.mxu0 0.0
    %794 = vmatpush1.msra.mxu0 0.0
    %795 = vmatprep.subr.mxu0 0.0
    %796 = vmatpush1.msra.mxu0 0.0
    %797 = vmatprep.subr.mxu0 0.0
    %798 = vmatpush1.msra.mxu0 %v29
    %799 = vmatprep.subr.mxu0 0.0
    %800 = vmatpush1.msra.mxu0 %v28
    %801 = vmatprep.subr.mxu0 0.0
    %802 = vmatpush1.msra.mxu0 %v27
    %803 = vmatprep.subr.mxu0 0.0
    %804 = vmatpush1.msra.mxu0 %v26
    %805 = vmatprep.subr.mxu0 0.0
    %806 = vmatpush1.msra.mxu0 %v25
    %807 = vmatprep.subr.mxu0 0.0
    %808 = vmatpush1.msra.mxu0 %v24
    %809 = vmatprep.subr.mxu0 0.0
    %810 = vmatpush1.msra.mxu0 %v23
    %811 = vmatprep.subr.mxu0 0.0
    %812 = vmatpush1.msra.mxu0 %v22
    %813 = vmatprep.subr.mxu0 0.0
    %814 = vmatpush2.msra.mxu0 0.0
    %815 = vmatprep.subr.mxu0 0.0
    %816 = vmatpush2.msra.mxu0 0.0
    %817 = vmatprep.subr.mxu0 0.0
    %818 = vmatpush2.msra.mxu0 0.0
    %819 = vmatprep.subr.mxu0 0.0
    %820 = vmatpush2.msra.mxu0 0.0
    %821 = vmatprep.subr.mxu0 0.0
    %822 = vmatpush2.msra.mxu0 0.0
    %823 = vmatprep.subr.mxu0 0.0
    %824 = vmatpush2.msra.mxu0 0.0
    %825 = vmatprep.subr.mxu0 0.0
    %826 = vmatpush2.msra.mxu0 0.0
    %827 = vmatprep.subr.mxu0 0.0
    %828 = vmatpush2.msra.mxu0 0.0
    %829 = vmatprep.subr.mxu0 0.0
    %830 = vmatpush2.msra.mxu0 0.0
    %831 = vmatprep.subr.mxu0 0.0
    %832 = vmatpush2.msra.mxu0 0.0
    %833 = vmatprep.subr.mxu0 0.0
    %834 = vmatpush2.msra.mxu0 0.0
    %835 = vmatprep.subr.mxu0 0.0
    %836 = vmatpush2.msra.mxu0 0.0
    %837 = vmatprep.subr.mxu0 0.0
    %838 = vmatpush2.msra.mxu0 0.0
    %839 = vmatprep.subr.mxu0 0.0
    %840 = vmatpush2.msra.mxu0 0.0
    %841 = vmatprep.subr.mxu0 0.0
    %842 = vmatpush2.msra.mxu0 0.0
    %843 = vmatprep.subr.mxu0 0.0
    %844 = vmatpush2.msra.mxu0 0.0
    %845 = vmatprep.mubr.f32.mxu0 0.0
    %846 = vmatmul.mubr.f32.gmra.mxu0 %v779
    %v847 = vpop.f32.mrf.mxu0
    %v848 = vadd.f32 %v776, %v847
    %v849 = vpop.f32.mrf.mxu0
    %850 = vdwg.mxu0
    %v851 = vsub.f32 %v848, 5.0
    %v852 = vmax.f32 %v851, 0.0
    %v853 = vand.u32 2147483647, %v851
    %v854 = vsub.f32 0.0, %v853
    %v855 = vmul.f32 %v854, 1.442695
    %v856 = vpow.pop %v855
    %v857 = vadd.f32 %v856, 1.0
    %v858 = vlog2.pop %v857
    %v859 = vmul.f32 %v858, 0.6931472
    %v860 = vmul.f32 -0.5, %v856
    %v861 = vadd.f32 %v860, 1.0
    %v862 = vmul.f32 %v861, %v856
    %v863 = vand.u32 2147483647, %v856
    %vm864 = vcmp.lt.f32.partialorder %v863, 0.0004427343
    %v865 = vsel %vm864, %v862, %v859
    %v866 = vadd.f32 %v852, %v865
    %vm867 = vcmask 261120
    %v868 = vsel %vm867, %v848, %v866
    %v869 = vlaneseq
    %v870 = vshrl.u32 %v869, 7
    %v871 = vadd.s32 %v870, 8
    %v872 = vadd.s32 %v870, 16
    %v873 = vlaneseq
    %v874 = vand.u32 %v873, 127
    %v875 = vmul.u32 %v874, 12
    %vm876 = vcmp.ge.s32.totalorder %v870, %v875
    %vm877 = vcmp.ge.s32.totalorder %v871, %v875
    %vm878 = vcmp.ge.s32.totalorder %v872, %v875
    %v879 = vadd.s32 %v875, 12
    %vm880 = vcmp.lt.s32.totalorder %v870, %v879
    %vm881 = vcmp.lt.s32.totalorder %v871, %v879
    %vm882 = vcmp.lt.s32.totalorder %v872, %v879
    %vm883 = vmand %vm876, %vm880
    %vm884 = vmand %vm877, %vm881
    %vm885 = vmand %vm878, %vm882
    %v886 = vsel %vm883, 1, 0
    %v887 = vsel %vm884, 1, 0
    %v888 = vsel %vm885, 1, 0
    %v889 = vcvt.s32.f32 %v886
    %v890 = vcvt.s32.f32 %v887
    %v891 = vcvt.s32.f32 %v888
    %vm892 = vcmask 15360
    %v894 = vsel %vm892, %v889, 0
    %v897 = vsel %vm892, %v890, 0
    %v900 = vsel %vm892, %v891, 0
    %vm902 = vcmask 1041408
    %v904 = vsel %vm902, %v868, 0
    %906 = vmatprep.subr.mxu0 0.0
    %907 = vmatpush1.msra.mxu0 0.0
    %908 = vmatprep.subr.mxu0 0.0
    %909 = vmatpush1.msra.mxu0 0.0
    %910 = vmatprep.subr.mxu0 0.0
    %911 = vmatpush1.msra.mxu0 0.0
    %912 = vmatprep.subr.mxu0 0.0
    %913 = vmatpush1.msra.mxu0 0.0
    %914 = vmatprep.subr.mxu0 0.0
    %915 = vmatpush1.msra.mxu0 0.0
    %916 = vmatprep.subr.mxu0 0.0
    %917 = vmatpush1.msra.mxu0 0.0
    %918 = vmatprep.subr.mxu0 0.0
    %919 = vmatpush1.msra.mxu0 0.0
    %920 = vmatprep.subr.mxu0 0.0
    %921 = vmatpush1.msra.mxu0 0.0
    %922 = vmatprep.subr.mxu0 0.0
    %923 = vmatpush1.msra.mxu0 0.0
    %924 = vmatprep.subr.mxu0 0.0
    %925 = vmatpush1.msra.mxu0 0.0
    %926 = vmatprep.subr.mxu0 0.0
    %927 = vmatpush1.msra.mxu0 0.0
    %928 = vmatprep.subr.mxu0 0.0
    %929 = vmatpush1.msra.mxu0 0.0
    %930 = vmatprep.subr.mxu0 0.0
    %931 = vmatpush1.msra.mxu0 0.0
    %932 = vmatprep.subr.mxu0 0.0
    %933 = vmatpush1.msra.mxu0 0.0
    %934 = vmatprep.subr.mxu0 0.0
    %935 = vmatpush1.msra.mxu0 0.0
    %936 = vmatprep.subr.mxu0 0.0
    %937 = vmatpush1.msra.mxu0 %v904
    %938 = vmatprep.subr.mxu0 0.0
    %939 = vmatpush2.msra.mxu0 0.0
    %940 = vmatprep.subr.mxu0 0.0
    %941 = vmatpush2.msra.mxu0 0.0
    %942 = vmatprep.subr.mxu0 0.0
    %943 = vmatpush2.msra.mxu0 0.0
    %944 = vmatprep.subr.mxu0 0.0
    %945 = vmatpush2.msra.mxu0 0.0
    %946 = vmatprep.subr.mxu0 0.0
    %947 = vmatpush2.msra.mxu0 0.0
    %948 = vmatprep.subr.mxu0 0.0
    %949 = vmatpush2.msra.mxu0 0.0
    %950 = vmatprep.subr.mxu0 0.0
    %951 = vmatpush2.msra.mxu0 0.0
    %952 = vmatprep.subr.mxu0 0.0
    %953 = vmatpush2.msra.mxu0 0.0
    %954 = vmatprep.subr.mxu0 0.0
    %955 = vmatpush2.msra.mxu0 0.0
    %956 = vmatprep.subr.mxu0 0.0
    %957 = vmatpush2.msra.mxu0 0.0
    %958 = vmatprep.subr.mxu0 0.0
    %959 = vmatpush2.msra.mxu0 0.0
    %960 = vmatprep.subr.mxu0 0.0
    %961 = vmatpush2.msra.mxu0 0.0
    %962 = vmatprep.subr.mxu0 0.0
    %963 = vmatpush2.msra.mxu0 0.0
    %964 = vmatprep.subr.mxu0 0.0
    %965 = vmatpush2.msra.mxu0 0.0
    %966 = vmatprep.subr.mxu0 0.0
    %967 = vmatpush2.msra.mxu0 0.0
    %968 = vmatprep.subr.mxu0 0.0
    %969 = vmatpush2.msra.mxu0 0.0
    %970 = vmatprep.mubr.f32.mxu0 0.0
    %971 = vmatmul.mubr.f32.gmra.mxu0 %v894
    %v972 = vpop.f32.mrf.mxu0
    %v973 = vadd.f32 0.0, %v972
    %v974 = vpop.f32.mrf.mxu0
    %975 = vmatprep.mubr.f32.mxu0 0.0
    %976 = vmatmul.mubr.f32.gmra.mxu0 %v897
    %v977 = vpop.f32.mrf.mxu0
    %v978 = vadd.f32 0.0, %v977
    %v979 = vpop.f32.mrf.mxu0
    %980 = vmatprep.mubr.f32.mxu0 0.0
    %981 = vmatmul.mubr.f32.gmra.mxu0 %v900
    %v982 = vpop.f32.mrf.mxu0
    %v983 = vadd.f32 0.0, %v982
    %v984 = vpop.f32.mrf.mxu0
    %985 = vdwg.mxu0
    %v986 = vld [vmem:[%s3] sm:$0xff]
    %v987 = vld [vmem:[%s3 + $0x8] sm:$0xff]
    %v988 = vld [vmem:[%s3 + $0x10] sm:$0xff]
    %992 = vrot.lane.b32.xlu0 %v986, 32
    %v993 = vpop.permute.xlu0 %992
    %994 = vrot.lane.b32.xlu0 %v987, 32
    %v995 = vpop.permute.xlu0 %994
    %996 = vrot.lane.b32.xlu0 %v988, 32
    %v997 = vpop.permute.xlu0 %996
    %v1001 = vmul.f32 %v973, %v993
    %v1002 = vmul.f32 %v978, %v995
    %v1003 = vmul.f32 %v983, %v997
    %1007 = vrot.lane.b32.xlu0 %v1001, 96
    %v1008 = vpop.permute.xlu0 %1007
    %1009 = vrot.lane.b32.xlu0 %v1002, 96
    %v1010 = vpop.permute.xlu0 %1009
    %1011 = vrot.lane.b32.xlu0 %v1003, 96
    %v1012 = vpop.permute.xlu0 %1011
    %v1016 = vadd.f32 %v973, %v1008
    %v1017 = vadd.f32 %v978, %v1010
    %v1018 = vadd.f32 %v983, %v1012
    %v1019 = vmul.f32 %v1016, 0.999995
    %v1020 = vmul.f32 %v1017, 0.999995
    %v1021 = vmul.f32 %v1018, 0.999995
    %1022 = vst.msk [vmem:[#allocation4] sm:$0xff] %vm867, %v1019
    %1023 = vst.msk [vmem:[#allocation4 + $0x8] sm:$0xff] %vm867, %v1020
    %1024 = vst.msk [vmem:[#allocation4 + $0x10] sm:$0xff] %vm867, %v1021
    %v1025 = vlaneseq
    %v1026 = vshrl.u32 %v1025, 7
    %v1027 = vsub.s32 0, %v1026
    %v1028 = vrot.slane %v36, %v1027
    %v1030 = vsel %vm867, %v1019, 0
    %v1033 = vsel %vm867, %v1020, 0
    %v1036 = vsel %vm867, %v1021, 0
    %1038 = vmatprep.subr.mxu0 0.0
    %1039 = vmatpush1.msra.mxu0 0.0
    %1040 = vmatprep.subr.mxu0 0.0
    %1041 = vmatpush1.msra.mxu0 0.0
    %1042 = vmatprep.subr.mxu0 0.0
    %1043 = vmatpush1.msra.mxu0 0.0
    %1044 = vmatprep.subr.mxu0 0.0
    %1045 = vmatpush1.msra.mxu0 0.0
    %1046 = vmatprep.subr.mxu0 0.0
    %1047 = vmatpush1.msra.mxu0 0.0
    %1048 = vmatprep.subr.mxu0 0.0
    %1049 = vmatpush1.msra.mxu0 0.0
    %1050 = vmatprep.subr.mxu0 0.0
    %1051 = vmatpush1.msra.mxu0 0.0
    %1052 = vmatprep.subr.mxu0 0.0
    %1053 = vmatpush1.msra.mxu0 0.0
    %1054 = vmatprep.subr.mxu0 0.0
    %1055 = vmatpush1.msra.mxu0 0.0
    %1056 = vmatprep.subr.mxu0 0.0
    %1057 = vmatpush1.msra.mxu0 0.0
    %1058 = vmatprep.subr.mxu0 0.0
    %1059 = vmatpush1.msra.mxu0 0.0
    %1060 = vmatprep.subr.mxu0 0.0
    %1061 = vmatpush1.msra.mxu0 0.0
    %1062 = vmatprep.subr.mxu0 0.0
    %1063 = vmatpush1.msra.mxu0 %v33
    %1064 = vmatprep.subr.mxu0 0.0
    %1065 = vmatpush1.msra.mxu0 %v32
    %1066 = vmatprep.subr.mxu0 0.0
    %1067 = vmatpush1.msra.mxu0 %v31
    %1068 = vmatprep.subr.mxu0 0.0
    %1069 = vmatpush1.msra.mxu0 %v30
    %1070 = vmatprep.subr.mxu0 0.0
    %1071 = vmatpush2.msra.mxu0 0.0
    %1072 = vmatprep.subr.mxu0 0.0
    %1073 = vmatpush2.msra.mxu0 0.0
    %1074 = vmatprep.subr.mxu0 0.0
    %1075 = vmatpush2.msra.mxu0 0.0
    %1076 = vmatprep.subr.mxu0 0.0
    %1077 = vmatpush2.msra.mxu0 0.0
    %1078 = vmatprep.subr.mxu0 0.0
    %1079 = vmatpush2.msra.mxu0 0.0
    %1080 = vmatprep.subr.mxu0 0.0
    %1081 = vmatpush2.msra.mxu0 0.0
    %1082 = vmatprep.subr.mxu0 0.0
    %1083 = vmatpush2.msra.mxu0 0.0
    %1084 = vmatprep.subr.mxu0 0.0
    %1085 = vmatpush2.msra.mxu0 0.0
    %1086 = vmatprep.subr.mxu0 0.0
    %1087 = vmatpush2.msra.mxu0 0.0
    %1088 = vmatprep.subr.mxu0 0.0
    %1089 = vmatpush2.msra.mxu0 0.0
    %1090 = vmatprep.subr.mxu0 0.0
    %1091 = vmatpush2.msra.mxu0 0.0
    %1092 = vmatprep.subr.mxu0 0.0
    %1093 = vmatpush2.msra.mxu0 0.0
    %1094 = vmatprep.subr.mxu0 0.0
    %1095 = vmatpush2.msra.mxu0 0.0
    %1096 = vmatprep.subr.mxu0 0.0
    %1097 = vmatpush2.msra.mxu0 0.0
    %1098 = vmatprep.subr.mxu0 0.0
    %1099 = vmatpush2.msra.mxu0 0.0
    %1100 = vmatprep.subr.mxu0 0.0
    %1101 = vmatpush2.msra.mxu0 0.0
    %1102 = vmatprep.mubr.f32.mxu0 0.0
    %1103 = vmatmul.mubr.f32.gmra.mxu0 %v1030
    %v1104 = vpop.f32.mrf.mxu0
    %v1105 = vadd.f32 %v1028, %v1104
    %v1106 = vpop.f32.mrf.mxu0
    %1107 = vmatprep.mubr.f32.mxu0 0.0
    %1108 = vmatmul.mubr.f32.gmra.mxu0 %v1033
    %v1109 = vpop.f32.mrf.mxu0
    %v1110 = vadd.f32 %v1028, %v1109
    %v1111 = vpop.f32.mrf.mxu0
    %1112 = vmatprep.mubr.f32.mxu0 0.0
    %1113 = vmatmul.mubr.f32.gmra.mxu0 %v1036
    %v1114 = vpop.f32.mrf.mxu0
    %v1115 = vadd.f32 %v1028, %v1114
    %v1116 = vpop.f32.mrf.mxu0
    %1117 = vdwg.mxu0
    %vm1118 = vcmask 80896
    %v1119 = vsel %vm1118, %v1105, -inf
    %1120 = vmax.xlane.f32.xlu0 %v1119
    %v1121 = vpop.xlane.xlu0 %1120
    %v1122 = vsel %vm1118, %v1110, -inf
    %1123 = vmax.xlane.f32.xlu0 %v1122
    %v1124 = vpop.xlane.xlu0 %1123
    %v1125 = vsel %vm1118, %v1115, -inf
    %1126 = vmax.xlane.f32.xlu0 %v1125
    %v1127 = vpop.xlane.xlu0 %1126
    %v1128 = vsub.f32 %v1105, %v1121
    %v1129 = vsub.f32 %v1110, %v1124
    %v1130 = vsub.f32 %v1115, %v1127
    %v1131 = vmul.f32 %v1128, 1.442695
    %v1132 = vpow.pop %v1131
    %v1133 = vmul.f32 %v1129, 1.442695
    %v1134 = vpow.pop %v1133
    %v1135 = vmul.f32 %v1130, 1.442695
    %v1136 = vpow.pop %v1135
    %v1137 = vsel %vm1118, %v1132, 0.0
    %1138 = vadd.xlane.f32.xlu0 %v1137
    %v1139 = vpop.xlane.xlu0 %1138
    %v1140 = vsel %vm1118, %v1134, 0.0
    %1141 = vadd.xlane.f32.xlu0 %v1140
    %v1142 = vpop.xlane.xlu0 %1141
    %v1143 = vsel %vm1118, %v1136, 0.0
    %1144 = vadd.xlane.f32.xlu0 %v1143
    %v1145 = vpop.xlane.xlu0 %1144
    %v1146 = vlog2.pop %v1139
    %v1147 = vmul.f32 %v1146, 0.6931472
    %v1148 = vlog2.pop %v1142
    %v1149 = vmul.f32 %v1148, 0.6931472
    %v1150 = vlog2.pop %v1145
    %v1151 = vmul.f32 %v1150, 0.6931472
    %v1152 = vadd.f32 %v1121, %v1147
    %v1153 = vadd.f32 %v1124, %v1149
    %v1154 = vadd.f32 %v1127, %v1151
    %v1155 = vsub.f32 %v1105, %v1152
    %v1156 = vsub.f32 %v1110, %v1153
    %v1157 = vsub.f32 %v1115, %v1154
    %v1158 = vsel %vm1118, %v1155, -inf
    %vm1159 = vcmask 76800
    %v1160 = vsel %vm1159, %v1156, -inf
    %v1161 = vmax.f32 %v1158, %v1160
    %v1162 = vrot.slane %v1161, 4
    %v1163 = vmax.f32 %v1161, %v1162
    %v1164 = vrot.slane %v1163, 2
    %v1165 = vmax.f32 %v1163, %v1164
    %v1166 = vrot.slane %v1165, 1
    %v1167 = vmax.f32 %v1165, %v1166
    %v1168 = vsub.f32 %v1155, %v1167
    %v1169 = vsub.f32 %v1156, %v1167
    %v1170 = vmul.f32 %v1168, 1.442695
    %v1171 = vpow.pop %v1170
    %v1172 = vmul.f32 %v1169, 1.442695
    %v1173 = vpow.pop %v1172
    %v1174 = vsel %vm1118, %v1171, 0.0
    %v1175 = vsel %vm1159, %v1173, 0.0
    %v1176 = vadd.f32 %v1174, %v1175
    %v1177 = vrot.slane %v1176, 4
    %v1178 = vadd.f32 %v1176, %v1177
    %v1179 = vrot.slane %v1178, 2
    %v1180 = vadd.f32 %v1178, %v1179
    %v1181 = vrot.slane %v1180, 1
    %v1182 = vadd.f32 %v1180, %v1181
    %v1183 = vlog2.pop %v1182
    %v1184 = vmul.f32 %v1183, 0.6931472
    %v1185 = vadd.f32 %v1167, %v1184
    %v1186 = vsub.f32 %v1185, 2.4849067
    %vm1187 = vcmask 80900
    %v1188 = vsel %vm1187, %v1156, -inf
    %v1189 = vsel %vm1118, %v1157, -inf
    %v1190 = vmax.f32 %v1188, %v1189
    %v1191 = vrot.slane %v1190, 4
    %v1192 = vmax.f32 %v1190, %v1191
    %v1193 = vrot.slane %v1192, 2
    %v1194 = vmax.f32 %v1192, %v1193
    %v1195 = vrot.slane %v1194, 1
    %v1196 = vmax.f32 %v1194, %v1195
    %v1197 = vsub.f32 %v1156, %v1196
    %v1198 = vsub.f32 %v1157, %v1196
    %v1199 = vmul.f32 %v1197, 1.442695
    %v1200 = vpow.pop %v1199
    %v1201 = vmul.f32 %v1198, 1.442695
    %v1202 = vpow.pop %v1201
    %vm1205 = vcmask 1043456
    %v1206 = vrot.slane %v1200, 4
    %v1207 = vrot.slane %v1202, 4
    %v1208 = vsel %vm1205, %v1206, %v1207
    %v1211 = vsel %vm1118, %v1208, 0.0
    %v1212 = vsel %vm1159, %v1207, 0.0
    %v1213 = vadd.f32 %v1211, %v1212
    %v1214 = vrot.slane %v1213, 4
    %v1215 = vadd.f32 %v1213, %v1214
    %v1216 = vrot.slane %v1215, 2
    %v1217 = vadd.f32 %v1215, %v1216
    %v1218 = vrot.slane %v1217, 1
    %v1219 = vadd.f32 %v1217, %v1218
    %v1220 = vlog2.pop %v1219
    %v1221 = vmul.f32 %v1220, 0.6931472
    %v1222 = vadd.f32 %v1196, %v1221
    %v1223 = vsub.f32 %v1222, 2.4849067
    %vm1224 = vcmask 1040384
    %v1225 = vsel %vm1224, %v1186, %v1223
    %vm1226 = vcmask 74752
    %1227 = vst.msk [vmem:[#allocation2] sm:$0x3] %vm1226, %v1225
    // Predicated region
    $region18: #{tpu_custom_call.1} parent=1 // pred_check
      _
    $region19: #{tpu_custom_call.1} parent=1 // pred_check_branch
      %1229 = sbr.rel (0) target = $region21
    $region20: #{tpu_custom_call.1} parent=1 // pred_region
      %s1231 = ssub.s32 32, 32
      %1232 = vsyncadd [#allocation3], %s1231
      %s1234 = sshll.u32 [#allocation2], 4
      %s1235 = int_to_ptr.vmem [resolvable:$true] %s1234
      %1237 = dma.vmem_to_hbm [thread:$0]  %s1235, 32, %s4, [#allocation3]
    $region21: #{tpu_custom_call.1} parent=1 // pred_fallthru
      _
    // Predicated region
    $region22: #{tpu_custom_call.1} parent=1 // pred_check
      _
    $region23: #{tpu_custom_call.1} parent=1 // pred_check_branch
      %1239 = sbr.rel (0) target = $region25
    $region24: #{tpu_custom_call.1} parent=1 // pred_region
      %s1241 = ssub.s32 384, 384
      %1242 = vsyncadd [#allocation5], %s1241
      %s1243 = sshll.u32 [#allocation4], 4
      %s1244 = int_to_ptr.vmem [resolvable:$true] %s1243
      %1249 = dma.vmem_to_hbm [thread:$0]  %s1244, 384, %s5, [#allocation5], 128, 128, 8
    $region25: #{tpu_custom_call.1} parent=1 // pred_fallthru
      _
    // Predicated region
    $region26: #{tpu_custom_call.1} parent=1 // pred_check
      _
    $region27: #{tpu_custom_call.1} parent=1 // pred_check_branch
      %1251 = sbr.rel (0) target = $region29
    $region28: #{tpu_custom_call.1} parent=1 // pred_region
      %1252 = dma.done [#allocation3], 32
    $region29: #{tpu_custom_call.1} parent=1 // pred_fallthru
      _
    // Predicated region
    $region30: #{tpu_custom_call.1} parent=1 // pred_check
      _
    $region31: #{tpu_custom_call.1} parent=1 // pred_check_branch
      %1254 = sbr.rel (0) target = $region33
    $region32: #{tpu_custom_call.1} parent=1 // pred_region
      %1255 = dma.done [#allocation5], 384
    $region33: #{tpu_custom_call.1} parent=1 // pred_fallthru
      _
    %1256 = vsyncpa [#allocation3], 1
    %1257 = vsyncpa [#allocation5], 1

</llo_original>
